<compile_context>
chip_gen: v6e
topology: v6e:2x2x1
jax: 0.10.0
libtpu: 0.0.40
codegen_flags: <defaults>
</compile_context>

<pallas_src>
import functools
import math

import jax
import jax.numpy as jnp
from jax.experimental import pallas as pl
from jax.experimental.pallas import tpu as pltpu


def _flash_sdpa_kernel(q_ref, k_ref, v_ref, mask_ref, o_ref,
                       m_sc, l_sc, acc_sc, *, scale):
    kv = pl.program_id(2)

    @pl.when(kv == 0)
    def _():
        m_sc[...] = jnp.full_like(m_sc, -jnp.inf)
        l_sc[...] = jnp.zeros_like(l_sc)
        acc_sc[...] = jnp.zeros_like(acc_sc)

    # Fold 1/sqrt(d_k) into Q (native dtype; MXU accumulates in f32).
    q = q_ref[...]
    q = q * jnp.asarray(scale, dtype=q.dtype)
    k = k_ref[...]
    v = v_ref[...]

    # scores = Q @ K^T for this (q-tile, kv-tile) block.
    s = jnp.einsum("gqd,gkd->gqk", q, k, preferred_element_type=jnp.float32)

    # masked_fill_(attn_mask, -1e9): mask arrives as int8 (nonzero => masked).
    s = jnp.where(mask_ref[...] != 0, jnp.float32(-1.0e9), s)

    # Online softmax update (f32 statistics).
    m_prev = m_sc[...]
    m_new = jnp.maximum(m_prev, jnp.max(s, axis=-1, keepdims=True))
    alpha = jnp.exp(m_prev - m_new)
    p = jnp.exp(s - m_new)
    l_sc[...] = alpha * l_sc[...] + jnp.sum(p, axis=-1, keepdims=True)
    acc_sc[...] = alpha * acc_sc[...] + jnp.einsum(
        "gqk,gkd->gqd", p.astype(v.dtype), v,
        preferred_element_type=jnp.float32)
    m_sc[...] = m_new

    @pl.when(kv == pl.num_programs(2) - 1)
    def _():
        inv_l = pl.reciprocal(l_sc[...], approx=True)   # EUP, ~free next to exp
        o_ref[...] = (acc_sc[...] * inv_l).astype(o_ref.dtype)


def _pick_seq_tile(s):
    """Largest nice tile that divides S (falls back to full S)."""
    for t in (256, 128):
        if s >= t and s % t == 0:
            return t
    return s


def _pick_group(bh, tq):
    """Group several (batch, head) pairs per step so G*tq gives the MXU work."""
    cap = max(1, min(bh, max(1, 256 // max(tq, 1))))
    for g in range(cap, 0, -1):
        if bh % g == 0:
            return g
    return 1


def scaled_dot_product_attention(Q, K, V, attn_mask, d_k):
    """Q, K, V: [B, H, S, d_k]; attn_mask: bool [B, H, S, S] (True = masked)."""
    B, H, S, D = Q.shape
    BH = B * H

    q = Q.reshape(BH, S, D)
    k = K.reshape(BH, S, D)
    v = V.reshape(BH, S, D)
    # int8 mask: 4x less DMA than int32, applied as a select in-kernel.
    mask = attn_mask.reshape(BH, S, S).astype(jnp.int8)

    tq = _pick_seq_tile(S)
    tk = _pick_seq_tile(S)
    G = _pick_group(BH, tq)
    grid = (BH // G, S // tq, S // tk)

    kernel = functools.partial(_flash_sdpa_kernel, scale=1.0 / math.sqrt(d_k))

    itemsize = jnp.dtype(Q.dtype).itemsize
    cost = pl.CostEstimate(
        flops=4 * BH * S * S * D,
        transcendentals=BH * S * S,
        bytes_accessed=(3 * BH * S * D + BH * S * D) * itemsize + BH * S * S,
    )

    out = pl.pallas_call(
        kernel,
        out_shape=jax.ShapeDtypeStruct((BH, S, D), Q.dtype),
        grid_spec=pltpu.PrefetchScalarGridSpec(
            num_scalar_prefetch=0,
            grid=grid,
            in_specs=[
                pl.BlockSpec((G, tq, D), lambda b, qi, ki: (b, qi, 0)),
                pl.BlockSpec((G, tk, D), lambda b, qi, ki: (b, ki, 0)),
                pl.BlockSpec((G, tk, D), lambda b, qi, ki: (b, ki, 0)),
                pl.BlockSpec((G, tq, tk), lambda b, qi, ki: (b, qi, ki)),
            ],
            out_specs=pl.BlockSpec((G, tq, D), lambda b, qi, ki: (b, qi, 0)),
            scratch_shapes=[
                pltpu.VMEM((G, tq, 1), jnp.float32),   # running max m
                pltpu.VMEM((G, tq, 1), jnp.float32),   # running sum l
                pltpu.VMEM((G, tq, D), jnp.float32),   # f32 accumulator
            ],
        ),
        compiler_params=pltpu.CompilerParams(
            dimension_semantics=("parallel", "parallel", "arbitrary")),
        cost_estimate=cost,
    )(q, k, v, mask)

    return out.reshape(B, H, S, D)


def _reference(Q, K, V, attn_mask, d_k):
    scores = jnp.einsum("bhqd,bhkd->bhqk", Q.astype(jnp.float32),
                        K.astype(jnp.float32)) / jnp.sqrt(jnp.float32(d_k))
    scores = jnp.where(attn_mask, -1.0e9, scores)
    attn = jax.nn.softmax(scores, axis=-1)
    return jnp.einsum("bhqk,bhkd->bhqd", attn, V.astype(jnp.float32))


if __name__ == "__main__":
    B, H, S, d_k = 2, 2, 8, 32

    key = jax.random.PRNGKey(0)
    kq, kk, kv = jax.random.split(key, 3)
    Q = jax.random.normal(kq, (B, H, S, d_k), dtype=jnp.float32)
    K = jax.random.normal(kk, (B, H, S, d_k), dtype=jnp.float32)
    V = jax.random.normal(kv, (B, H, S, d_k), dtype=jnp.float32)

    # Causal attention mask (True => masked out), broadcast to every batch/head.
    causal = jnp.triu(jnp.ones((S, S), dtype=jnp.bool_), k=1)
    attn_mask = jnp.broadcast_to(causal, (B, H, S, S))

    out = scaled_dot_product_attention(Q, K, V, attn_mask, d_k)
    out = jax.block_until_ready(out)

    ref = _reference(Q, K, V, attn_mask, d_k)
    assert out.shape == (B, H, S, d_k)
    # Slightly relaxed tolerance to accommodate the EUP approx-reciprocal at
    # the softmax finalize step (far inside typical attention tolerances).
    assert jnp.allclose(out, ref.astype(out.dtype), atol=2e-3, rtol=2e-3)

    print("KERNEL_OK")
</pallas_src>

<mosaic_0001>
module attributes {stable_mosaic.version = 11 : i64} {
  func.func @_flash_sdpa_kernel(%arg0: i32, %arg1: i32, %arg2: i32, %arg3: memref<4x8x32xf32, #tpu.memory_space<vmem>>, %arg4: memref<4x8x32xf32, #tpu.memory_space<vmem>>, %arg5: memref<4x8x32xf32, #tpu.memory_space<vmem>>, %arg6: memref<4x8x8xi8, #tpu.memory_space<vmem>>, %arg7: memref<4x8x32xf32, #tpu.memory_space<vmem>>, %arg8: memref<4x8x1xf32, #tpu.memory_space<vmem>>, %arg9: memref<4x8x1xf32, #tpu.memory_space<vmem>>, %arg10: memref<4x8x32xf32, #tpu.memory_space<vmem>>) attributes {dimension_semantics = [#tpu.dimension_semantics<parallel>, #tpu.dimension_semantics<parallel>, #tpu.dimension_semantics<arbitrary>], iteration_bounds = array<i64: 1, 1, 1>, scalar_prefetch = 0 : i64, scratch_operands = 3 : i64, tpu.core_type = #tpu.core_type<tc>, window_params = [{transform_indices = @transform_0, window_bounds = array<i64: 4, 8, 32>}, {transform_indices = @transform_1, window_bounds = array<i64: 4, 8, 32>}, {transform_indices = @transform_2, window_bounds = array<i64: 4, 8, 32>}, {transform_indices = @transform_3, window_bounds = array<i64: 4, 8, 8>}, {transform_indices = @transform_4, window_bounds = array<i64: 4, 8, 32>}]} {
    %c0_i32 = arith.constant 0 : i32
    %0 = arith.cmpi eq, %arg2, %c0_i32 : i32
    %1 = arith.extui %0 : i1 to i32
    %c0_i32_0 = arith.constant 0 : i32
    %2 = arith.cmpi ne, %1, %c0_i32_0 : i32
    scf.if %2 {
      %cst_37 = arith.constant 0xFF800000 : f32
      %39 = vector.broadcast %cst_37 : f32 to vector<4x8x1xf32>
      %c0_38 = arith.constant 0 : index
      %c0_39 = arith.constant 0 : index
      %c0_40 = arith.constant 0 : index
      %40 = vector.load %arg8[%c0_38, %c0_39, %c0_40] : memref<4x8x1xf32, #tpu.memory_space<vmem>>, vector<4x8x1xf32>
      tpu.vector_store %arg8[%c0_38, %c0_39, %c0_40], %39 {strides = array<i32>} : memref<4x8x1xf32, #tpu.memory_space<vmem>>, vector<4x8x1xf32>,
      %cst_41 = arith.constant 0.000000e+00 : f32
      %41 = vector.broadcast %cst_41 : f32 to vector<4x8x1xf32>
      %c0_42 = arith.constant 0 : index
      %c0_43 = arith.constant 0 : index
      %c0_44 = arith.constant 0 : index
      %42 = vector.load %arg9[%c0_42, %c0_43, %c0_44] : memref<4x8x1xf32, #tpu.memory_space<vmem>>, vector<4x8x1xf32>
      tpu.vector_store %arg9[%c0_42, %c0_43, %c0_44], %41 {strides = array<i32>} : memref<4x8x1xf32, #tpu.memory_space<vmem>>, vector<4x8x1xf32>,
      %cst_45 = arith.constant 0.000000e+00 : f32
      %43 = vector.broadcast %cst_45 : f32 to vector<4x8x32xf32>
      %c0_46 = arith.constant 0 : index
      %c0_47 = arith.constant 0 : index
      %c0_48 = arith.constant 0 : index
      %44 = vector.load %arg10[%c0_46, %c0_47, %c0_48] : memref<4x8x32xf32, #tpu.memory_space<vmem>>, vector<4x8x32xf32>
      tpu.vector_store %arg10[%c0_46, %c0_47, %c0_48], %43 {strides = array<i32>} : memref<4x8x32xf32, #tpu.memory_space<vmem>>, vector<4x8x32xf32>,
    } else {
    }
    %c0 = arith.constant 0 : index
    %c0_1 = arith.constant 0 : index
    %c0_2 = arith.constant 0 : index
    %3 = vector.load %arg3[%c0, %c0_1, %c0_2] : memref<4x8x32xf32, #tpu.memory_space<vmem>>, vector<4x8x32xf32>
    %cst = arith.constant 0.176776692 : f32
    %4 = vector.broadcast %cst : f32 to vector<4x8x32xf32>
    %5 = arith.mulf %3, %4 : vector<4x8x32xf32>
    %c0_3 = arith.constant 0 : index
    %c0_4 = arith.constant 0 : index
    %c0_5 = arith.constant 0 : index
    %6 = vector.load %arg4[%c0_3, %c0_4, %c0_5] : memref<4x8x32xf32, #tpu.memory_space<vmem>>, vector<4x8x32xf32>
    %c0_6 = arith.constant 0 : index
    %c0_7 = arith.constant 0 : index
    %c0_8 = arith.constant 0 : index
    %7 = vector.load %arg5[%c0_6, %c0_7, %c0_8] : memref<4x8x32xf32, #tpu.memory_space<vmem>>, vector<4x8x32xf32>
    "tpu.trace_start"() <{level = 10 : i32, message = "gqd,gkd->gqk"}> : () -> ()
    %cst_9 = arith.constant dense<0.000000e+00> : vector<4x8x8xf32>
    %8 = tpu.matmul %5, %6, %cst_9 {dimension_numbers = #tpu.dot_dimension_numbers<[2], [2], [1], [1], [0, 0, 0, 1, 1, 1], [0], [0]>} : vector<4x8x32xf32>, vector<4x8x32xf32>, vector<4x8x8xf32> -> vector<4x8x8xf32>
    "tpu.trace_stop"() : () -> ()
    %c0_10 = arith.constant 0 : index
    %c0_11 = arith.constant 0 : index
    %c0_12 = arith.constant 0 : index
    %9 = vector.load %arg6[%c0_10, %c0_11, %c0_12] : memref<4x8x8xi8, #tpu.memory_space<vmem>>, vector<4x8x8xi8>
    %c0_i8 = arith.constant 0 : i8
    %10 = vector.broadcast %c0_i8 : i8 to vector<4x8x8xi8>
    %11 = arith.cmpi ne, %9, %10 : vector<4x8x8xi8>
    %cst_13 = arith.constant -1.000000e+09 : f32
    %12 = vector.broadcast %cst_13 : f32 to vector<4x8x8xf32>
    %13 = arith.select %11, %12, %8 : vector<4x8x8xi1>, vector<4x8x8xf32>
    %c0_14 = arith.constant 0 : index
    %c0_15 = arith.constant 0 : index
    %c0_16 = arith.constant 0 : index
    %14 = vector.load %arg8[%c0_14, %c0_15, %c0_16] : memref<4x8x1xf32, #tpu.memory_space<vmem>>, vector<4x8x1xf32>
    %cst_17 = arith.constant dense<0xFF800000> : vector<4x8xf32>
    %15 = vector.multi_reduction <maximumf>, %13, %cst_17 [2] : vector<4x8x8xf32> to vector<4x8xf32>
    %16 = vector.shape_cast %15 : vector<4x8xf32> to vector<4x8x1xf32>
    %17 = arith.maximumf %14, %16 : vector<4x8x1xf32>
    %18 = arith.subf %14, %17 : vector<4x8x1xf32>
    %19 = math.exp %18 : vector<4x8x1xf32>
    %20 = vector.broadcast %17 : vector<4x8x1xf32> to vector<4x8x8xf32>
    %21 = arith.subf %13, %20 : vector<4x8x8xf32>
    %22 = math.exp %21 : vector<4x8x8xf32>
    %c0_18 = arith.constant 0 : index
    %c0_19 = arith.constant 0 : index
    %c0_20 = arith.constant 0 : index
    %23 = vector.load %arg9[%c0_18, %c0_19, %c0_20] : memref<4x8x1xf32, #tpu.memory_space<vmem>>, vector<4x8x1xf32>
    %24 = arith.mulf %19, %23 : vector<4x8x1xf32>
    %cst_21 = arith.constant dense<0.000000e+00> : vector<4x8xf32>
    %25 = vector.multi_reduction <add>, %22, %cst_21 [2] : vector<4x8x8xf32> to vector<4x8xf32>
    %26 = vector.shape_cast %25 : vector<4x8xf32> to vector<4x8x1xf32>
    %27 = arith.addf %24, %26 : vector<4x8x1xf32>
    %c0_22 = arith.constant 0 : index
    %c0_23 = arith.constant 0 : index
    %c0_24 = arith.constant 0 : index
    %28 = vector.load %arg9[%c0_22, %c0_23, %c0_24] : memref<4x8x1xf32, #tpu.memory_space<vmem>>, vector<4x8x1xf32>
    tpu.vector_store %arg9[%c0_22, %c0_23, %c0_24], %27 {strides = array<i32>} : memref<4x8x1xf32, #tpu.memory_space<vmem>>, vector<4x8x1xf32>,
    %c0_25 = arith.constant 0 : index
    %c0_26 = arith.constant 0 : index
    %c0_27 = arith.constant 0 : index
    %29 = vector.load %arg10[%c0_25, %c0_26, %c0_27] : memref<4x8x32xf32, #tpu.memory_space<vmem>>, vector<4x8x32xf32>
    %30 = vector.broadcast %19 : vector<4x8x1xf32> to vector<4x8x32xf32>
    %31 = arith.mulf %30, %29 : vector<4x8x32xf32>
    "tpu.trace_start"() <{level = 10 : i32, message = "gqk,gkd->gqd"}> : () -> ()
    %cst_28 = arith.constant dense<0.000000e+00> : vector<4x8x32xf32>
    %32 = tpu.matmul %22, %7, %cst_28 {dimension_numbers = #tpu.dot_dimension_numbers<[2], [1], [1], [2], [0, 0, 0, 1, 1, 2], [0], [0]>} : vector<4x8x8xf32>, vector<4x8x32xf32>, vector<4x8x32xf32> -> vector<4x8x32xf32>
    "tpu.trace_stop"() : () -> ()
    %33 = arith.addf %31, %32 : vector<4x8x32xf32>
    %c0_29 = arith.constant 0 : index
    %c0_30 = arith.constant 0 : index
    %c0_31 = arith.constant 0 : index
    %34 = vector.load %arg10[%c0_29, %c0_30, %c0_31] : memref<4x8x32xf32, #tpu.memory_space<vmem>>, vector<4x8x32xf32>
    tpu.vector_store %arg10[%c0_29, %c0_30, %c0_31], %33 {strides = array<i32>} : memref<4x8x32xf32, #tpu.memory_space<vmem>>, vector<4x8x32xf32>,
    %c0_32 = arith.constant 0 : index
    %c0_33 = arith.constant 0 : index
    %c0_34 = arith.constant 0 : index
    %35 = vector.load %arg8[%c0_32, %c0_33, %c0_34] : memref<4x8x1xf32, #tpu.memory_space<vmem>>, vector<4x8x1xf32>
    tpu.vector_store %arg8[%c0_32, %c0_33, %c0_34], %17 {strides = array<i32>} : memref<4x8x1xf32, #tpu.memory_space<vmem>>, vector<4x8x1xf32>,
    %c0_i32_35 = arith.constant 0 : i32
    %36 = arith.cmpi eq, %arg2, %c0_i32_35 : i32
    %37 = arith.extui %36 : i1 to i32
    %c0_i32_36 = arith.constant 0 : i32
    %38 = arith.cmpi ne, %37, %c0_i32_36 : i32
    scf.if %38 {
      %c0_37 = arith.constant 0 : index
      %c0_38 = arith.constant 0 : index
      %c0_39 = arith.constant 0 : index
      %39 = vector.load %arg9[%c0_37, %c0_38, %c0_39] : memref<4x8x1xf32, #tpu.memory_space<vmem>>, vector<4x8x1xf32>
      %40 = tpu.reciprocal %39 {approx = true} : vector<4x8x1xf32> -> vector<4x8x1xf32>
      %c0_40 = arith.constant 0 : index
      %c0_41 = arith.constant 0 : index
      %c0_42 = arith.constant 0 : index
      %41 = vector.load %arg10[%c0_40, %c0_41, %c0_42] : memref<4x8x32xf32, #tpu.memory_space<vmem>>, vector<4x8x32xf32>
      %42 = vector.broadcast %40 : vector<4x8x1xf32> to vector<4x8x32xf32>
      %43 = arith.mulf %41, %42 : vector<4x8x32xf32>
      %c0_43 = arith.constant 0 : index
      %c0_44 = arith.constant 0 : index
      %c0_45 = arith.constant 0 : index
      %44 = vector.load %arg7[%c0_43, %c0_44, %c0_45] : memref<4x8x32xf32, #tpu.memory_space<vmem>>, vector<4x8x32xf32>
      tpu.vector_store %arg7[%c0_43, %c0_44, %c0_45], %43 {strides = array<i32>} : memref<4x8x32xf32, #tpu.memory_space<vmem>>, vector<4x8x32xf32>,
    } else {
    }
    return
  }
  func.func @transform_0(%arg0: i32, %arg1: i32, %arg2: i32) -> (i32, i32, i32) {
    %c0_i32 = arith.constant 0 : i32
    %c0_i32_0 = arith.constant 0 : i32
    return %arg0, %arg1, %c0_i32 : i32, i32, i32
  }
  func.func @transform_1(%arg0: i32, %arg1: i32, %arg2: i32) -> (i32, i32, i32) {
    %c0_i32 = arith.constant 0 : i32
    %c0_i32_0 = arith.constant 0 : i32
    return %arg0, %arg2, %c0_i32 : i32, i32, i32
  }
  func.func @transform_2(%arg0: i32, %arg1: i32, %arg2: i32) -> (i32, i32, i32) {
    %c0_i32 = arith.constant 0 : i32
    %c0_i32_0 = arith.constant 0 : i32
    return %arg0, %arg2, %c0_i32 : i32, i32, i32
  }
  func.func @transform_3(%arg0: i32, %arg1: i32, %arg2: i32) -> (i32, i32, i32) {
    %c0_i32 = arith.constant 0 : i32
    return %arg0, %arg1, %arg2 : i32, i32, i32
  }
  func.func @transform_4(%arg0: i32, %arg1: i32, %arg2: i32) -> (i32, i32, i32) {
    %c0_i32 = arith.constant 0 : i32
    %c0_i32_0 = arith.constant 0 : i32
    return %arg0, %arg1, %c0_i32 : i32, i32, i32
  }
}

</mosaic_0001>

<llo_original>
// kernel: tpu_custom_call.1
$region0: #{tpu_custom_call.1}
  #allocation0 [shape = 'u32[]', space=smem, size = 0x4, offset = 0x4, fixed_abs, tag = 'smem constant byte address 0x4 - core index']
  #allocation1 [shape = 'u32[144,128]{1,0:T(1,128)}', space=vmem, size = 0x12000, scoped, tag = 'internal scratch']
  #allocation2 [shape = 'f32[4,8,1]{2,1,0:T(8,128)}', space=vmem, size = 0x4000, scoped, tag = 'scratch operand']
  #allocation3 [shape = 'f32[4,8,1]{2,1,0:T(8,128)}', space=vmem, size = 0x4000, scoped, tag = 'scratch operand']
  #allocation4 [shape = 'f32[4,8,32]{2,1,0:T(8,128)}', space=vmem, size = 0x4000, scoped, tag = 'scratch operand']
  %s0 = inlined_call_operand.hbm [shape: f32[4,8,32], index: 0, kind: input, shape index: {}]
  %s1 = inlined_call_operand.hbm [shape: f32[4,8,32], index: 1, kind: input, shape index: {}]
  %s2 = inlined_call_operand.hbm [shape: f32[4,8,32], index: 2, kind: input, shape index: {}]
  %s3 = inlined_call_operand.hbm [shape: s8[4,8,8], index: 3, kind: input, shape index: {}]
  %s4 = inlined_call_operand.hbm [shape: f32[4,8,32], index: 4, kind: output, shape index: {}]
  %s5 = sld [smem:[#allocation0]]
  $region50: #{tpu_custom_call.1} parent=0
    _
  %s7 = ssub.s32 1, %s5
  %s8 = scalar_select 0, %s7, %s5
  $region1: #{tpu_custom_call.1} parent=0
    #allocation5 [shape = 'u8[16384]{0}', space=vmem, size = 0x4000, scoped, tag = 'input window, operand 0, single buffered']
    #allocation6 [shape = 's32[1]{0}', space=sflag, size = 0x4, scoped, tag = 'scoped memory for tpu_custom_call.1']
    #allocation7 [shape = 's32[1]{0}', space=sflag, size = 0x4, scoped, tag = 'scoped memory for tpu_custom_call.1']
    #allocation8 [shape = 'u8[16384]{0}', space=vmem, size = 0x4000, scoped, tag = 'input window, operand 1, single buffered']
    #allocation9 [shape = 's32[1]{0}', space=sflag, size = 0x4, scoped, tag = 'scoped memory for tpu_custom_call.1']
    #allocation10 [shape = 'u8[16384]{0}', space=vmem, size = 0x4000, scoped, tag = 'input window, operand 2, single buffered']
    #allocation11 [shape = 'u8[4096]{0}', space=vmem, size = 0x1000, scoped, tag = 'input window, operand 3, single buffered']
    #allocation12 [shape = 's32[1]{0}', space=sflag, size = 0x4, scoped, tag = 'scoped memory for tpu_custom_call.1']
    #allocation13 [shape = 'u8[16384]{0}', space=vmem, size = 0x4000, scoped, tag = 'output window, operand 0, single buffered']
    %9 = vsyncpa [#allocation6], 0
    %10 = vsyncpa [#allocation9], 0
    %11 = vsyncpa [#allocation12], 0
    %12 = vsyncpa [#allocation7], 0
    // Predicated region
    $region2: #{tpu_custom_call.1} parent=1 // pred_check
      _
    $region3: #{tpu_custom_call.1} parent=1 // pred_check_branch
      %14 = sbr.rel (0) target = $region5
    $region4: #{tpu_custom_call.1} parent=1 // pred_region
      %s16 = ssub.s32 512, 512
      %17 = vsyncadd [#allocation6], %s16
      %s18 = sshll.u32 [#allocation5], 4
      %s19 = int_to_ptr.vmem [resolvable:$true] %s18
      %24 = dma.hbm_to_vmem [thread:$0]  %s0, 512, %s19, [#allocation6], 128, 128, 8
    $region5: #{tpu_custom_call.1} parent=1 // pred_fallthru
      _
    // Predicated region
    $region6: #{tpu_custom_call.1} parent=1 // pred_check
      _
    $region7: #{tpu_custom_call.1} parent=1 // pred_check_branch
      %26 = sbr.rel (0) target = $region9
    $region8: #{tpu_custom_call.1} parent=1 // pred_region
      %s28 = ssub.s32 512, 512
      %29 = vsyncadd [#allocation9], %s28
      %s30 = sshll.u32 [#allocation8], 4
      %s31 = int_to_ptr.vmem [resolvable:$true] %s30
      %36 = dma.hbm_to_vmem [thread:$0]  %s1, 512, %s31, [#allocation9], 128, 128, 8
    $region9: #{tpu_custom_call.1} parent=1 // pred_fallthru
      _
    // Predicated region
    $region10: #{tpu_custom_call.1} parent=1 // pred_check
      _
    $region11: #{tpu_custom_call.1} parent=1 // pred_check_branch
      %38 = sbr.rel (0) target = $region13
    $region12: #{tpu_custom_call.1} parent=1 // pred_region
      %s40 = ssub.s32 512, 512
      %41 = vsyncadd [#allocation9], %s40
      %s42 = sshll.u32 [#allocation10], 4
      %s43 = int_to_ptr.vmem [resolvable:$true] %s42
      %48 = dma.hbm_to_vmem [thread:$0]  %s2, 512, %s43, [#allocation9], 128, 128, 8
    $region13: #{tpu_custom_call.1} parent=1 // pred_fallthru
      _
    // Predicated region
    $region14: #{tpu_custom_call.1} parent=1 // pred_check
      _
    $region15: #{tpu_custom_call.1} parent=1 // pred_check_branch
      %50 = sbr.rel (0) target = $region17
    $region16: #{tpu_custom_call.1} parent=1 // pred_region
      %s52 = ssub.s32 128, 128
      %53 = vsyncadd [#allocation12], %s52
      %s54 = sshll.u32 [#allocation11], 4
      %s55 = int_to_ptr.vmem [resolvable:$true] %s54
      %60 = dma.hbm_to_vmem [thread:$0]  %s3, 128, %s55, [#allocation12], 32, 32, 2
    $region17: #{tpu_custom_call.1} parent=1 // pred_fallthru
      _
    // Predicated region
    $region18: #{tpu_custom_call.1} parent=1 // pred_check
      _
    $region19: #{tpu_custom_call.1} parent=1 // pred_check_branch
      %62 = sbr.rel (0) target = $region21
    $region20: #{tpu_custom_call.1} parent=1 // pred_region
      %63 = dma.done [#allocation6], 512
    $region21: #{tpu_custom_call.1} parent=1 // pred_fallthru
      _
    // Predicated region
    $region22: #{tpu_custom_call.1} parent=1 // pred_check
      _
    $region23: #{tpu_custom_call.1} parent=1 // pred_check_branch
      %65 = sbr.rel (0) target = $region25
    $region24: #{tpu_custom_call.1} parent=1 // pred_region
      %66 = dma.done [#allocation9], 512
    $region25: #{tpu_custom_call.1} parent=1 // pred_fallthru
      _
    // Predicated region
    $region26: #{tpu_custom_call.1} parent=1 // pred_check
      _
    $region27: #{tpu_custom_call.1} parent=1 // pred_check_branch
      %68 = sbr.rel (0) target = $region29
    $region28: #{tpu_custom_call.1} parent=1 // pred_region
      %69 = dma.done [#allocation9], 512
    $region29: #{tpu_custom_call.1} parent=1 // pred_fallthru
      _
    // Predicated region
    $region30: #{tpu_custom_call.1} parent=1 // pred_check
      _
    $region31: #{tpu_custom_call.1} parent=1 // pred_check_branch
      %71 = sbr.rel (0) target = $region33
    $region32: #{tpu_custom_call.1} parent=1 // pred_region
      %72 = dma.done [#allocation12], 128
    $region33: #{tpu_custom_call.1} parent=1 // pred_fallthru
      _
    %p75 = scmp.eq.s32.totalorder 0, 0
    // Predicated region
    $region34: #{tpu_custom_call.1} parent=1 // pred_check
      %p76 = pneg %p75
    $region35: #{tpu_custom_call.1} parent=1 // pred_check_branch
      %78 = sbr.rel (%p76) target = $region37
    $region36: #{tpu_custom_call.1} parent=1 // pred_region
      %vm79 = vcmask 7168
      %80 = vst.msk [vmem:[#allocation2] sm:$0xff] %vm79, -inf
      %81 = vst.msk [vmem:[#allocation2 + $0x8] sm:$0xff] %vm79, -inf
      %82 = vst.msk [vmem:[#allocation2 + $0x10] sm:$0xff] %vm79, -inf
      %83 = vst.msk [vmem:[#allocation2 + $0x18] sm:$0xff] %vm79, -inf
      %84 = vst.msk [vmem:[#allocation3] sm:$0xff] %vm79, 0.0
      %85 = vst.msk [vmem:[#allocation3 + $0x8] sm:$0xff] %vm79, 0.0
      %86 = vst.msk [vmem:[#allocation3 + $0x10] sm:$0xff] %vm79, 0.0
      %87 = vst.msk [vmem:[#allocation3 + $0x18] sm:$0xff] %vm79, 0.0
      %vm88 = vcmask 261120
      %89 = vst.msk [vmem:[#allocation4] sm:$0xff] %vm88, 0.0
      %90 = vst.msk [vmem:[#allocation4 + $0x8] sm:$0xff] %vm88, 0.0
      %91 = vst.msk [vmem:[#allocation4 + $0x10] sm:$0xff] %vm88, 0.0
      %92 = vst.msk [vmem:[#allocation4 + $0x18] sm:$0xff] %vm88, 0.0
    $region37: #{tpu_custom_call.1} parent=1 // pred_fallthru
      _
    %v93 = vld [vmem:[#allocation5] sm:$0xff]
    %v94 = vld [vmem:[#allocation5 + $0x8] sm:$0xff]
    %v95 = vld [vmem:[#allocation5 + $0x10] sm:$0xff]
    %v96 = vld [vmem:[#allocation5 + $0x18] sm:$0xff]
    %v97 = vmul.f32 %v93, 0.17677669
    %v98 = vmul.f32 %v94, 0.17677669
    %v99 = vmul.f32 %v95, 0.17677669
    %v100 = vmul.f32 %v96, 0.17677669
    %v101 = vld [vmem:[#allocation8] sm:$0xff]
    %v102 = vld [vmem:[#allocation8 + $0x8] sm:$0xff]
    %v103 = vld [vmem:[#allocation8 + $0x10] sm:$0xff]
    %v104 = vld [vmem:[#allocation8 + $0x18] sm:$0xff]
    %v105 = vld [vmem:[#allocation10] sm:$0xff]
    %v106 = vld [vmem:[#allocation10 + $0x8] sm:$0xff]
    %v107 = vld [vmem:[#allocation10 + $0x10] sm:$0xff]
    %v108 = vld [vmem:[#allocation10 + $0x18] sm:$0xff]
    %vm109 = vcmask 261120
    %v111 = vsel %vm109, %v97, 0
    %v114 = vsel %vm109, %v101, 0
    %116 = vmatprep.subr.mxu0 0.0
    %117 = vmatpush1.xpose.msra.mxu0 0.0
    %118 = vmatprep.subr.mxu0 0.0
    %119 = vmatpush1.xpose.msra.mxu0 0.0
    %120 = vmatprep.subr.mxu0 0.0
    %121 = vmatpush1.xpose.msra.mxu0 0.0
    %122 = vmatprep.subr.mxu0 0.0
    %123 = vmatpush1.xpose.msra.mxu0 0.0
    %124 = vmatprep.subr.mxu0 0.0
    %125 = vmatpush1.xpose.msra.mxu0 0.0
    %126 = vmatprep.subr.mxu0 0.0
    %127 = vmatpush1.xpose.msra.mxu0 0.0
    %128 = vmatprep.subr.mxu0 0.0
    %129 = vmatpush1.xpose.msra.mxu0 0.0
    %130 = vmatprep.subr.mxu0 0.0
    %131 = vmatpush1.xpose.msra.mxu0 0.0
    %132 = vmatprep.subr.mxu0 0.0
    %133 = vmatpush1.xpose.msra.mxu0 0.0
    %134 = vmatprep.subr.mxu0 0.0
    %135 = vmatpush1.xpose.msra.mxu0 0.0
    %136 = vmatprep.subr.mxu0 0.0
    %137 = vmatpush1.xpose.msra.mxu0 0.0
    %138 = vmatprep.subr.mxu0 0.0
    %139 = vmatpush1.xpose.msra.mxu0 0.0
    %140 = vmatprep.subr.mxu0 0.0
    %141 = vmatpush1.xpose.msra.mxu0 0.0
    %142 = vmatprep.subr.mxu0 0.0
    %143 = vmatpush1.xpose.msra.mxu0 0.0
    %144 = vmatprep.subr.mxu0 0.0
    %145 = vmatpush1.xpose.msra.mxu0 0.0
    %146 = vmatprep.subr.mxu0 0.0
    %147 = vmatpush1.xpose.msra.mxu0 %v114
    %148 = vmatprep.subr.mxu0 0.0
    %149 = vmatpush2.xpose.msra.mxu0 0.0
    %150 = vmatprep.subr.mxu0 0.0
    %151 = vmatpush2.xpose.msra.mxu0 0.0
    %152 = vmatprep.subr.mxu0 0.0
    %153 = vmatpush2.xpose.msra.mxu0 0.0
    %154 = vmatprep.subr.mxu0 0.0
    %155 = vmatpush2.xpose.msra.mxu0 0.0
    %156 = vmatprep.subr.mxu0 0.0
    %157 = vmatpush2.xpose.msra.mxu0 0.0
    %158 = vmatprep.subr.mxu0 0.0
    %159 = vmatpush2.xpose.msra.mxu0 0.0
    %160 = vmatprep.subr.mxu0 0.0
    %161 = vmatpush2.xpose.msra.mxu0 0.0
    %162 = vmatprep.subr.mxu0 0.0
    %163 = vmatpush2.xpose.msra.mxu0 0.0
    %164 = vmatprep.subr.mxu0 0.0
    %165 = vmatpush2.xpose.msra.mxu0 0.0
    %166 = vmatprep.subr.mxu0 0.0
    %167 = vmatpush2.xpose.msra.mxu0 0.0
    %168 = vmatprep.subr.mxu0 0.0
    %169 = vmatpush2.xpose.msra.mxu0 0.0
    %170 = vmatprep.subr.mxu0 0.0
    %171 = vmatpush2.xpose.msra.mxu0 0.0
    %172 = vmatprep.subr.mxu0 0.0
    %173 = vmatpush2.xpose.msra.mxu0 0.0
    %174 = vmatprep.subr.mxu0 0.0
    %175 = vmatpush2.xpose.msra.mxu0 0.0
    %176 = vmatprep.subr.mxu0 0.0
    %177 = vmatpush2.xpose.msra.mxu0 0.0
    %178 = vmatprep.subr.mxu0 0.0
    %179 = vmatpush2.xpose.msra.mxu0 0.0
    %180 = vmatprep.mubr.f32.mxu0 0.0
    %181 = vmatmul.mubr.f32.gmra.mxu0 %v111
    %v182 = vpop.f32.mrf.mxu0
    %v183 = vadd.f32 0.0, %v182
    %v184 = vpop.f32.mrf.mxu0
    %185 = vdwg.mxu0
    %v187 = vsel %vm109, %v98, 0
    %v190 = vsel %vm109, %v102, 0
    %192 = vmatprep.subr.mxu0 0.0
    %193 = vmatpush1.xpose.msra.mxu0 0.0
    %194 = vmatprep.subr.mxu0 0.0
    %195 = vmatpush1.xpose.msra.mxu0 0.0
    %196 = vmatprep.subr.mxu0 0.0
    %197 = vmatpush1.xpose.msra.mxu0 0.0
    %198 = vmatprep.subr.mxu0 0.0
    %199 = vmatpush1.xpose.msra.mxu0 0.0
    %200 = vmatprep.subr.mxu0 0.0
    %201 = vmatpush1.xpose.msra.mxu0 0.0
    %202 = vmatprep.subr.mxu0 0.0
    %203 = vmatpush1.xpose.msra.mxu0 0.0
    %204 = vmatprep.subr.mxu0 0.0
    %205 = vmatpush1.xpose.msra.mxu0 0.0
    %206 = vmatprep.subr.mxu0 0.0
    %207 = vmatpush1.xpose.msra.mxu0 0.0
    %208 = vmatprep.subr.mxu0 0.0
    %209 = vmatpush1.xpose.msra.mxu0 0.0
    %210 = vmatprep.subr.mxu0 0.0
    %211 = vmatpush1.xpose.msra.mxu0 0.0
    %212 = vmatprep.subr.mxu0 0.0
    %213 = vmatpush1.xpose.msra.mxu0 0.0
    %214 = vmatprep.subr.mxu0 0.0
    %215 = vmatpush1.xpose.msra.mxu0 0.0
    %216 = vmatprep.subr.mxu0 0.0
    %217 = vmatpush1.xpose.msra.mxu0 0.0
    %218 = vmatprep.subr.mxu0 0.0
    %219 = vmatpush1.xpose.msra.mxu0 0.0
    %220 = vmatprep.subr.mxu0 0.0
    %221 = vmatpush1.xpose.msra.mxu0 0.0
    %222 = vmatprep.subr.mxu0 0.0
    %223 = vmatpush1.xpose.msra.mxu0 %v190
    %224 = vmatprep.subr.mxu0 0.0
    %225 = vmatpush2.xpose.msra.mxu0 0.0
    %226 = vmatprep.subr.mxu0 0.0
    %227 = vmatpush2.xpose.msra.mxu0 0.0
    %228 = vmatprep.subr.mxu0 0.0
    %229 = vmatpush2.xpose.msra.mxu0 0.0
    %230 = vmatprep.subr.mxu0 0.0
    %231 = vmatpush2.xpose.msra.mxu0 0.0
    %232 = vmatprep.subr.mxu0 0.0
    %233 = vmatpush2.xpose.msra.mxu0 0.0
    %234 = vmatprep.subr.mxu0 0.0
    %235 = vmatpush2.xpose.msra.mxu0 0.0
    %236 = vmatprep.subr.mxu0 0.0
    %237 = vmatpush2.xpose.msra.mxu0 0.0
    %238 = vmatprep.subr.mxu0 0.0
    %239 = vmatpush2.xpose.msra.mxu0 0.0
    %240 = vmatprep.subr.mxu0 0.0
    %241 = vmatpush2.xpose.msra.mxu0 0.0
    %242 = vmatprep.subr.mxu0 0.0
    %243 = vmatpush2.xpose.msra.mxu0 0.0
    %244 = vmatprep.subr.mxu0 0.0
    %245 = vmatpush2.xpose.msra.mxu0 0.0
    %246 = vmatprep.subr.mxu0 0.0
    %247 = vmatpush2.xpose.msra.mxu0 0.0
    %248 = vmatprep.subr.mxu0 0.0
    %249 = vmatpush2.xpose.msra.mxu0 0.0
    %250 = vmatprep.subr.mxu0 0.0
    %251 = vmatpush2.xpose.msra.mxu0 0.0
    %252 = vmatprep.subr.mxu0 0.0
    %253 = vmatpush2.xpose.msra.mxu0 0.0
    %254 = vmatprep.subr.mxu0 0.0
    %255 = vmatpush2.xpose.msra.mxu0 0.0
    %256 = vmatprep.mubr.f32.mxu0 0.0
    %257 = vmatmul.mubr.f32.gmra.mxu0 %v187
    %v258 = vpop.f32.mrf.mxu0
    %v259 = vadd.f32 0.0, %v258
    %v260 = vpop.f32.mrf.mxu0
    %261 = vdwg.mxu0
    %v263 = vsel %vm109, %v99, 0
    %v266 = vsel %vm109, %v103, 0
    %268 = vmatprep.subr.mxu0 0.0
    %269 = vmatpush1.xpose.msra.mxu0 0.0
    %270 = vmatprep.subr.mxu0 0.0
    %271 = vmatpush1.xpose.msra.mxu0 0.0
    %272 = vmatprep.subr.mxu0 0.0
    %273 = vmatpush1.xpose.msra.mxu0 0.0
    %274 = vmatprep.subr.mxu0 0.0
    %275 = vmatpush1.xpose.msra.mxu0 0.0
    %276 = vmatprep.subr.mxu0 0.0
    %277 = vmatpush1.xpose.msra.mxu0 0.0
    %278 = vmatprep.subr.mxu0 0.0
    %279 = vmatpush1.xpose.msra.mxu0 0.0
    %280 = vmatprep.subr.mxu0 0.0
    %281 = vmatpush1.xpose.msra.mxu0 0.0
    %282 = vmatprep.subr.mxu0 0.0
    %283 = vmatpush1.xpose.msra.mxu0 0.0
    %284 = vmatprep.subr.mxu0 0.0
    %285 = vmatpush1.xpose.msra.mxu0 0.0
    %286 = vmatprep.subr.mxu0 0.0
    %287 = vmatpush1.xpose.msra.mxu0 0.0
    %288 = vmatprep.subr.mxu0 0.0
    %289 = vmatpush1.xpose.msra.mxu0 0.0
    %290 = vmatprep.subr.mxu0 0.0
    %291 = vmatpush1.xpose.msra.mxu0 0.0
    %292 = vmatprep.subr.mxu0 0.0
    %293 = vmatpush1.xpose.msra.mxu0 0.0
    %294 = vmatprep.subr.mxu0 0.0
    %295 = vmatpush1.xpose.msra.mxu0 0.0
    %296 = vmatprep.subr.mxu0 0.0
    %297 = vmatpush1.xpose.msra.mxu0 0.0
    %298 = vmatprep.subr.mxu0 0.0
    %299 = vmatpush1.xpose.msra.mxu0 %v266
    %300 = vmatprep.subr.mxu0 0.0
    %301 = vmatpush2.xpose.msra.mxu0 0.0
    %302 = vmatprep.subr.mxu0 0.0
    %303 = vmatpush2.xpose.msra.mxu0 0.0
    %304 = vmatprep.subr.mxu0 0.0
    %305 = vmatpush2.xpose.msra.mxu0 0.0
    %306 = vmatprep.subr.mxu0 0.0
    %307 = vmatpush2.xpose.msra.mxu0 0.0
    %308 = vmatprep.subr.mxu0 0.0
    %309 = vmatpush2.xpose.msra.mxu0 0.0
    %310 = vmatprep.subr.mxu0 0.0
    %311 = vmatpush2.xpose.msra.mxu0 0.0
    %312 = vmatprep.subr.mxu0 0.0
    %313 = vmatpush2.xpose.msra.mxu0 0.0
    %314 = vmatprep.subr.mxu0 0.0
    %315 = vmatpush2.xpose.msra.mxu0 0.0
    %316 = vmatprep.subr.mxu0 0.0
    %317 = vmatpush2.xpose.msra.mxu0 0.0
    %318 = vmatprep.subr.mxu0 0.0
    %319 = vmatpush2.xpose.msra.mxu0 0.0
    %320 = vmatprep.subr.mxu0 0.0
    %321 = vmatpush2.xpose.msra.mxu0 0.0
    %322 = vmatprep.subr.mxu0 0.0
    %323 = vmatpush2.xpose.msra.mxu0 0.0
    %324 = vmatprep.subr.mxu0 0.0
    %325 = vmatpush2.xpose.msra.mxu0 0.0
    %326 = vmatprep.subr.mxu0 0.0
    %327 = vmatpush2.xpose.msra.mxu0 0.0
    %328 = vmatprep.subr.mxu0 0.0
    %329 = vmatpush2.xpose.msra.mxu0 0.0
    %330 = vmatprep.subr.mxu0 0.0
    %331 = vmatpush2.xpose.msra.mxu0 0.0
    %332 = vmatprep.mubr.f32.mxu0 0.0
    %333 = vmatmul.mubr.f32.gmra.mxu0 %v263
    %v334 = vpop.f32.mrf.mxu0
    %v335 = vadd.f32 0.0, %v334
    %v336 = vpop.f32.mrf.mxu0
    %337 = vdwg.mxu0
    %v339 = vsel %vm109, %v100, 0
    %v342 = vsel %vm109, %v104, 0
    %344 = vmatprep.subr.mxu0 0.0
    %345 = vmatpush1.xpose.msra.mxu0 0.0
    %346 = vmatprep.subr.mxu0 0.0
    %347 = vmatpush1.xpose.msra.mxu0 0.0
    %348 = vmatprep.subr.mxu0 0.0
    %349 = vmatpush1.xpose.msra.mxu0 0.0
    %350 = vmatprep.subr.mxu0 0.0
    %351 = vmatpush1.xpose.msra.mxu0 0.0
    %352 = vmatprep.subr.mxu0 0.0
    %353 = vmatpush1.xpose.msra.mxu0 0.0
    %354 = vmatprep.subr.mxu0 0.0
    %355 = vmatpush1.xpose.msra.mxu0 0.0
    %356 = vmatprep.subr.mxu0 0.0
    %357 = vmatpush1.xpose.msra.mxu0 0.0
    %358 = vmatprep.subr.mxu0 0.0
    %359 = vmatpush1.xpose.msra.mxu0 0.0
    %360 = vmatprep.subr.mxu0 0.0
    %361 = vmatpush1.xpose.msra.mxu0 0.0
    %362 = vmatprep.subr.mxu0 0.0
    %363 = vmatpush1.xpose.msra.mxu0 0.0
    %364 = vmatprep.subr.mxu0 0.0
    %365 = vmatpush1.xpose.msra.mxu0 0.0
    %366 = vmatprep.subr.mxu0 0.0
    %367 = vmatpush1.xpose.msra.mxu0 0.0
    %368 = vmatprep.subr.mxu0 0.0
    %369 = vmatpush1.xpose.msra.mxu0 0.0
    %370 = vmatprep.subr.mxu0 0.0
    %371 = vmatpush1.xpose.msra.mxu0 0.0
    %372 = vmatprep.subr.mxu0 0.0
    %373 = vmatpush1.xpose.msra.mxu0 0.0
    %374 = vmatprep.subr.mxu0 0.0
    %375 = vmatpush1.xpose.msra.mxu0 %v342
    %376 = vmatprep.subr.mxu0 0.0
    %377 = vmatpush2.xpose.msra.mxu0 0.0
    %378 = vmatprep.subr.mxu0 0.0
    %379 = vmatpush2.xpose.msra.mxu0 0.0
    %380 = vmatprep.subr.mxu0 0.0
    %381 = vmatpush2.xpose.msra.mxu0 0.0
    %382 = vmatprep.subr.mxu0 0.0
    %383 = vmatpush2.xpose.msra.mxu0 0.0
    %384 = vmatprep.subr.mxu0 0.0
    %385 = vmatpush2.xpose.msra.mxu0 0.0
    %386 = vmatprep.subr.mxu0 0.0
    %387 = vmatpush2.xpose.msra.mxu0 0.0
    %388 = vmatprep.subr.mxu0 0.0
    %389 = vmatpush2.xpose.msra.mxu0 0.0
    %390 = vmatprep.subr.mxu0 0.0
    %391 = vmatpush2.xpose.msra.mxu0 0.0
    %392 = vmatprep.subr.mxu0 0.0
    %393 = vmatpush2.xpose.msra.mxu0 0.0
    %394 = vmatprep.subr.mxu0 0.0
    %395 = vmatpush2.xpose.msra.mxu0 0.0
    %396 = vmatprep.subr.mxu0 0.0
    %397 = vmatpush2.xpose.msra.mxu0 0.0
    %398 = vmatprep.subr.mxu0 0.0
    %399 = vmatpush2.xpose.msra.mxu0 0.0
    %400 = vmatprep.subr.mxu0 0.0
    %401 = vmatpush2.xpose.msra.mxu0 0.0
    %402 = vmatprep.subr.mxu0 0.0
    %403 = vmatpush2.xpose.msra.mxu0 0.0
    %404 = vmatprep.subr.mxu0 0.0
    %405 = vmatpush2.xpose.msra.mxu0 0.0
    %406 = vmatprep.subr.mxu0 0.0
    %407 = vmatpush2.xpose.msra.mxu0 0.0
    %408 = vmatprep.mubr.f32.mxu0 0.0
    %409 = vmatmul.mubr.f32.gmra.mxu0 %v339
    %v410 = vpop.f32.mrf.mxu0
    %v411 = vadd.f32 0.0, %v410
    %v412 = vpop.f32.mrf.mxu0
    %413 = vdwg.mxu0
    %v414 = vld [vmem:[#allocation11] sm:$0x3]
    %v415 = vld [vmem:[#allocation11 + $0x2] sm:$0x3]
    %v416 = vld [vmem:[#allocation11 + $0x4] sm:$0x3]
    %v417 = vld [vmem:[#allocation11 + $0x6] sm:$0x3]
    %vm418 = vnez %v414
    %vm419 = vnez %v415
    %vm420 = vnez %v416
    %vm421 = vnez %v417
    %v422 = vsel %vm418, 16843009, 0
    %v423 = vsel %vm419, 16843009, 0
    %v424 = vsel %vm420, 16843009, 0
    %v425 = vsel %vm421, 16843009, 0
    %v426 = vunpack.c.0.s8 %v422
    %v427 = vunpack.c.0.s8 %v423
    %v428 = vunpack.c.0.s8 %v424
    %v429 = vunpack.c.0.s8 %v425
    %vm430 = vcmp.ne.s32.totalorder %v426, 0
    %vm431 = vcmp.ne.s32.totalorder %v427, 0
    %vm432 = vcmp.ne.s32.totalorder %v428, 0
    %vm433 = vcmp.ne.s32.totalorder %v429, 0
    %v434 = vsel %vm430, -1e+09, %v183
    %v435 = vsel %vm431, -1e+09, %v259
    %v436 = vsel %vm432, -1e+09, %v335
    %v437 = vsel %vm433, -1e+09, %v411
    %v438 = vld [vmem:[#allocation2] sm:$0xff]
    %v439 = vld [vmem:[#allocation2 + $0x8] sm:$0xff]
    %v440 = vld [vmem:[#allocation2 + $0x10] sm:$0xff]
    %v441 = vld [vmem:[#allocation2 + $0x18] sm:$0xff]
    %vm442 = vcmask 64512
    %v443 = vsel %vm442, %v434, -inf
    %444 = vmax.xlane.f32.xlu0 %v443
    %v445 = vpop.xlane.xlu0 %444
    %v446 = vsel %vm442, %v435, -inf
    %447 = vmax.xlane.f32.xlu0 %v446
    %v448 = vpop.xlane.xlu0 %447
    %v449 = vsel %vm442, %v436, -inf
    %450 = vmax.xlane.f32.xlu0 %v449
    %v451 = vpop.xlane.xlu0 %450
    %v452 = vsel %vm442, %v437, -inf
    %453 = vmax.xlane.f32.xlu0 %v452
    %v454 = vpop.xlane.xlu0 %453
    %v455 = vmax.f32 %v438, %v445
    %v456 = vmax.f32 %v439, %v448
    %v457 = vmax.f32 %v440, %v451
    %v458 = vmax.f32 %v441, %v454
    %v459 = vsub.f32 %v438, %v455
    %v460 = vsub.f32 %v439, %v456
    %v461 = vsub.f32 %v440, %v457
    %v462 = vsub.f32 %v441, %v458
    %v463 = vmul.f32 %v459, 1.442695
    %v464 = vpow.pop %v463
    %v465 = vmul.f32 %v460, 1.442695
    %v466 = vpow.pop %v465
    %v467 = vmul.f32 %v461, 1.442695
    %v468 = vpow.pop %v467
    %v469 = vmul.f32 %v462, 1.442695
    %v470 = vpow.pop %v469
    %472 = vset.pattern.permute.xlu0 0
    %473 = vperm.xlu0 %472, %v455
    %v474 = vpop.permute.xlu0 %473
    %477 = vset.pattern.permute.xlu0 0
    %478 = vperm.xlu0 %477, %v456
    %v479 = vpop.permute.xlu0 %478
    %482 = vset.pattern.permute.xlu0 0
    %483 = vperm.xlu0 %482, %v457
    %v484 = vpop.permute.xlu0 %483
    %487 = vset.pattern.permute.xlu0 0
    %488 = vperm.xlu0 %487, %v458
    %v489 = vpop.permute.xlu0 %488
    %v491 = vsub.f32 %v434, %v474
    %v492 = vsub.f32 %v435, %v479
    %v493 = vsub.f32 %v436, %v484
    %v494 = vsub.f32 %v437, %v489
    %v495 = vmul.f32 %v491, 1.442695
    %v496 = vpow.pop %v495
    %v497 = vmul.f32 %v492, 1.442695
    %v498 = vpow.pop %v497
    %v499 = vmul.f32 %v493, 1.442695
    %v500 = vpow.pop %v499
    %v501 = vmul.f32 %v494, 1.442695
    %v502 = vpow.pop %v501
    %v503 = vld [vmem:[#allocation3] sm:$0xff]
    %v504 = vld [vmem:[#allocation3 + $0x8] sm:$0xff]
    %v505 = vld [vmem:[#allocation3 + $0x10] sm:$0xff]
    %v506 = vld [vmem:[#allocation3 + $0x18] sm:$0xff]
    %v507 = vmul.f32 %v464, %v503
    %v508 = vmul.f32 %v466, %v504
    %v509 = vmul.f32 %v468, %v505
    %v510 = vmul.f32 %v470, %v506
    %v511 = vsel %vm442, %v496, 0.0
    %512 = vadd.xlane.f32.xlu0 %v511
    %v513 = vpop.xlane.xlu0 %512
    %v514 = vsel %vm442, %v498, 0.0
    %515 = vadd.xlane.f32.xlu0 %v514
    %v516 = vpop.xlane.xlu0 %515
    %v517 = vsel %vm442, %v500, 0.0
    %518 = vadd.xlane.f32.xlu0 %v517
    %v519 = vpop.xlane.xlu0 %518
    %v520 = vsel %vm442, %v502, 0.0
    %521 = vadd.xlane.f32.xlu0 %v520
    %v522 = vpop.xlane.xlu0 %521
    %v523 = vadd.f32 %v507, %v513
    %v524 = vadd.f32 %v508, %v516
    %v525 = vadd.f32 %v509, %v519
    %v526 = vadd.f32 %v510, %v522
    %vm527 = vcmask 7168
    %528 = vst.msk [vmem:[#allocation3] sm:$0xff] %vm527, %v523
    %529 = vst.msk [vmem:[#allocation3 + $0x8] sm:$0xff] %vm527, %v524
    %530 = vst.msk [vmem:[#allocation3 + $0x10] sm:$0xff] %vm527, %v525
    %531 = vst.msk [vmem:[#allocation3 + $0x18] sm:$0xff] %vm527, %v526
    %v532 = vld [vmem:[#allocation4] sm:$0xff]
    %v533 = vld [vmem:[#allocation4 + $0x8] sm:$0xff]
    %v534 = vld [vmem:[#allocation4 + $0x10] sm:$0xff]
    %v535 = vld [vmem:[#allocation4 + $0x18] sm:$0xff]
    %537 = vset.pattern.permute.xlu0 0
    %538 = vperm.xlu0 %537, %v464
    %v539 = vpop.permute.xlu0 %538
    %542 = vset.pattern.permute.xlu0 0
    %543 = vperm.xlu0 %542, %v466
    %v544 = vpop.permute.xlu0 %543
    %547 = vset.pattern.permute.xlu0 0
    %548 = vperm.xlu0 %547, %v468
    %v549 = vpop.permute.xlu0 %548
    %552 = vset.pattern.permute.xlu0 0
    %553 = vperm.xlu0 %552, %v470
    %v554 = vpop.permute.xlu0 %553
    %v556 = vmul.f32 %v539, %v532
    %v557 = vmul.f32 %v544, %v533
    %v558 = vmul.f32 %v549, %v534
    %v559 = vmul.f32 %v554, %v535
    %v561 = vsel %vm442, %v496, 0
    %563 = vmatprep.subr.mxu0 0.0
    %564 = vmatpush1.msra.mxu0 0.0
    %565 = vmatprep.subr.mxu0 0.0
    %566 = vmatpush1.msra.mxu0 0.0
    %567 = vmatprep.subr.mxu0 0.0
    %568 = vmatpush1.msra.mxu0 0.0
    %569 = vmatprep.subr.mxu0 0.0
    %570 = vmatpush1.msra.mxu0 0.0
    %571 = vmatprep.subr.mxu0 0.0
    %572 = vmatpush1.msra.mxu0 0.0
    %573 = vmatprep.subr.mxu0 0.0
    %574 = vmatpush1.msra.mxu0 0.0
    %575 = vmatprep.subr.mxu0 0.0
    %576 = vmatpush1.msra.mxu0 0.0
    %577 = vmatprep.subr.mxu0 0.0
    %578 = vmatpush1.msra.mxu0 0.0
    %579 = vmatprep.subr.mxu0 0.0
    %580 = vmatpush1.msra.mxu0 0.0
    %581 = vmatprep.subr.mxu0 0.0
    %582 = vmatpush1.msra.mxu0 0.0
    %583 = vmatprep.subr.mxu0 0.0
    %584 = vmatpush1.msra.mxu0 0.0
    %585 = vmatprep.subr.mxu0 0.0
    %586 = vmatpush1.msra.mxu0 0.0
    %587 = vmatprep.subr.mxu0 0.0
    %588 = vmatpush1.msra.mxu0 0.0
    %589 = vmatprep.subr.mxu0 0.0
    %590 = vmatpush1.msra.mxu0 0.0
    %591 = vmatprep.subr.mxu0 0.0
    %592 = vmatpush1.msra.mxu0 0.0
    %593 = vmatprep.subr.mxu0 0.0
    %594 = vmatpush1.msra.mxu0 %v105
    %595 = vmatprep.subr.mxu0 0.0
    %596 = vmatpush2.msra.mxu0 0.0
    %597 = vmatprep.subr.mxu0 0.0
    %598 = vmatpush2.msra.mxu0 0.0
    %599 = vmatprep.subr.mxu0 0.0
    %600 = vmatpush2.msra.mxu0 0.0
    %601 = vmatprep.subr.mxu0 0.0
    %602 = vmatpush2.msra.mxu0 0.0
    %603 = vmatprep.subr.mxu0 0.0
    %604 = vmatpush2.msra.mxu0 0.0
    %605 = vmatprep.subr.mxu0 0.0
    %606 = vmatpush2.msra.mxu0 0.0
    %607 = vmatprep.subr.mxu0 0.0
    %608 = vmatpush2.msra.mxu0 0.0
    %609 = vmatprep.subr.mxu0 0.0
    %610 = vmatpush2.msra.mxu0 0.0
    %611 = vmatprep.subr.mxu0 0.0
    %612 = vmatpush2.msra.mxu0 0.0
    %613 = vmatprep.subr.mxu0 0.0
    %614 = vmatpush2.msra.mxu0 0.0
    %615 = vmatprep.subr.mxu0 0.0
    %616 = vmatpush2.msra.mxu0 0.0
    %617 = vmatprep.subr.mxu0 0.0
    %618 = vmatpush2.msra.mxu0 0.0
    %619 = vmatprep.subr.mxu0 0.0
    %620 = vmatpush2.msra.mxu0 0.0
    %621 = vmatprep.subr.mxu0 0.0
    %622 = vmatpush2.msra.mxu0 0.0
    %623 = vmatprep.subr.mxu0 0.0
    %624 = vmatpush2.msra.mxu0 0.0
    %625 = vmatprep.subr.mxu0 0.0
    %626 = vmatpush2.msra.mxu0 0.0
    %627 = vmatprep.mubr.f32.mxu0 0.0
    %628 = vmatmul.mubr.f32.gmra.mxu0 %v561
    %v629 = vpop.f32.mrf.mxu0
    %v630 = vadd.f32 0.0, %v629
    %v631 = vpop.f32.mrf.mxu0
    %632 = vdwg.mxu0
    %v634 = vsel %vm442, %v498, 0
    %636 = vmatprep.subr.mxu0 0.0
    %637 = vmatpush1.msra.mxu0 0.0
    %638 = vmatprep.subr.mxu0 0.0
    %639 = vmatpush1.msra.mxu0 0.0
    %640 = vmatprep.subr.mxu0 0.0
    %641 = vmatpush1.msra.mxu0 0.0
    %642 = vmatprep.subr.mxu0 0.0
    %643 = vmatpush1.msra.mxu0 0.0
    %644 = vmatprep.subr.mxu0 0.0
    %645 = vmatpush1.msra.mxu0 0.0
    %646 = vmatprep.subr.mxu0 0.0
    %647 = vmatpush1.msra.mxu0 0.0
    %648 = vmatprep.subr.mxu0 0.0
    %649 = vmatpush1.msra.mxu0 0.0
    %650 = vmatprep.subr.mxu0 0.0
    %651 = vmatpush1.msra.mxu0 0.0
    %652 = vmatprep.subr.mxu0 0.0
    %653 = vmatpush1.msra.mxu0 0.0
    %654 = vmatprep.subr.mxu0 0.0
    %655 = vmatpush1.msra.mxu0 0.0
    %656 = vmatprep.subr.mxu0 0.0
    %657 = vmatpush1.msra.mxu0 0.0
    %658 = vmatprep.subr.mxu0 0.0
    %659 = vmatpush1.msra.mxu0 0.0
    %660 = vmatprep.subr.mxu0 0.0
    %661 = vmatpush1.msra.mxu0 0.0
    %662 = vmatprep.subr.mxu0 0.0
    %663 = vmatpush1.msra.mxu0 0.0
    %664 = vmatprep.subr.mxu0 0.0
    %665 = vmatpush1.msra.mxu0 0.0
    %666 = vmatprep.subr.mxu0 0.0
    %667 = vmatpush1.msra.mxu0 %v106
    %668 = vmatprep.subr.mxu0 0.0
    %669 = vmatpush2.msra.mxu0 0.0
    %670 = vmatprep.subr.mxu0 0.0
    %671 = vmatpush2.msra.mxu0 0.0
    %672 = vmatprep.subr.mxu0 0.0
    %673 = vmatpush2.msra.mxu0 0.0
    %674 = vmatprep.subr.mxu0 0.0
    %675 = vmatpush2.msra.mxu0 0.0
    %676 = vmatprep.subr.mxu0 0.0
    %677 = vmatpush2.msra.mxu0 0.0
    %678 = vmatprep.subr.mxu0 0.0
    %679 = vmatpush2.msra.mxu0 0.0
    %680 = vmatprep.subr.mxu0 0.0
    %681 = vmatpush2.msra.mxu0 0.0
    %682 = vmatprep.subr.mxu0 0.0
    %683 = vmatpush2.msra.mxu0 0.0
    %684 = vmatprep.subr.mxu0 0.0
    %685 = vmatpush2.msra.mxu0 0.0
    %686 = vmatprep.subr.mxu0 0.0
    %687 = vmatpush2.msra.mxu0 0.0
    %688 = vmatprep.subr.mxu0 0.0
    %689 = vmatpush2.msra.mxu0 0.0
    %690 = vmatprep.subr.mxu0 0.0
    %691 = vmatpush2.msra.mxu0 0.0
    %692 = vmatprep.subr.mxu0 0.0
    %693 = vmatpush2.msra.mxu0 0.0
    %694 = vmatprep.subr.mxu0 0.0
    %695 = vmatpush2.msra.mxu0 0.0
    %696 = vmatprep.subr.mxu0 0.0
    %697 = vmatpush2.msra.mxu0 0.0
    %698 = vmatprep.subr.mxu0 0.0
    %699 = vmatpush2.msra.mxu0 0.0
    %700 = vmatprep.mubr.f32.mxu0 0.0
    %701 = vmatmul.mubr.f32.gmra.mxu0 %v634
    %v702 = vpop.f32.mrf.mxu0
    %v703 = vadd.f32 0.0, %v702
    %v704 = vpop.f32.mrf.mxu0
    %705 = vdwg.mxu0
    %v707 = vsel %vm442, %v500, 0
    %709 = vmatprep.subr.mxu0 0.0
    %710 = vmatpush1.msra.mxu0 0.0
    %711 = vmatprep.subr.mxu0 0.0
    %712 = vmatpush1.msra.mxu0 0.0
    %713 = vmatprep.subr.mxu0 0.0
    %714 = vmatpush1.msra.mxu0 0.0
    %715 = vmatprep.subr.mxu0 0.0
    %716 = vmatpush1.msra.mxu0 0.0
    %717 = vmatprep.subr.mxu0 0.0
    %718 = vmatpush1.msra.mxu0 0.0
    %719 = vmatprep.subr.mxu0 0.0
    %720 = vmatpush1.msra.mxu0 0.0
    %721 = vmatprep.subr.mxu0 0.0
    %722 = vmatpush1.msra.mxu0 0.0
    %723 = vmatprep.subr.mxu0 0.0
    %724 = vmatpush1.msra.mxu0 0.0
    %725 = vmatprep.subr.mxu0 0.0
    %726 = vmatpush1.msra.mxu0 0.0
    %727 = vmatprep.subr.mxu0 0.0
    %728 = vmatpush1.msra.mxu0 0.0
    %729 = vmatprep.subr.mxu0 0.0
    %730 = vmatpush1.msra.mxu0 0.0
    %731 = vmatprep.subr.mxu0 0.0
    %732 = vmatpush1.msra.mxu0 0.0
    %733 = vmatprep.subr.mxu0 0.0
    %734 = vmatpush1.msra.mxu0 0.0
    %735 = vmatprep.subr.mxu0 0.0
    %736 = vmatpush1.msra.mxu0 0.0
    %737 = vmatprep.subr.mxu0 0.0
    %738 = vmatpush1.msra.mxu0 0.0
    %739 = vmatprep.subr.mxu0 0.0
    %740 = vmatpush1.msra.mxu0 %v107
    %741 = vmatprep.subr.mxu0 0.0
    %742 = vmatpush2.msra.mxu0 0.0
    %743 = vmatprep.subr.mxu0 0.0
    %744 = vmatpush2.msra.mxu0 0.0
    %745 = vmatprep.subr.mxu0 0.0
    %746 = vmatpush2.msra.mxu0 0.0
    %747 = vmatprep.subr.mxu0 0.0
    %748 = vmatpush2.msra.mxu0 0.0
    %749 = vmatprep.subr.mxu0 0.0
    %750 = vmatpush2.msra.mxu0 0.0
    %751 = vmatprep.subr.mxu0 0.0
    %752 = vmatpush2.msra.mxu0 0.0
    %753 = vmatprep.subr.mxu0 0.0
    %754 = vmatpush2.msra.mxu0 0.0
    %755 = vmatprep.subr.mxu0 0.0
    %756 = vmatpush2.msra.mxu0 0.0
    %757 = vmatprep.subr.mxu0 0.0
    %758 = vmatpush2.msra.mxu0 0.0
    %759 = vmatprep.subr.mxu0 0.0
    %760 = vmatpush2.msra.mxu0 0.0
    %761 = vmatprep.subr.mxu0 0.0
    %762 = vmatpush2.msra.mxu0 0.0
    %763 = vmatprep.subr.mxu0 0.0
    %764 = vmatpush2.msra.mxu0 0.0
    %765 = vmatprep.subr.mxu0 0.0
    %766 = vmatpush2.msra.mxu0 0.0
    %767 = vmatprep.subr.mxu0 0.0
    %768 = vmatpush2.msra.mxu0 0.0
    %769 = vmatprep.subr.mxu0 0.0
    %770 = vmatpush2.msra.mxu0 0.0
    %771 = vmatprep.subr.mxu0 0.0
    %772 = vmatpush2.msra.mxu0 0.0
    %773 = vmatprep.mubr.f32.mxu0 0.0
    %774 = vmatmul.mubr.f32.gmra.mxu0 %v707
    %v775 = vpop.f32.mrf.mxu0
    %v776 = vadd.f32 0.0, %v775
    %v777 = vpop.f32.mrf.mxu0
    %778 = vdwg.mxu0
    %v780 = vsel %vm442, %v502, 0
    %782 = vmatprep.subr.mxu0 0.0
    %783 = vmatpush1.msra.mxu0 0.0
    %784 = vmatprep.subr.mxu0 0.0
    %785 = vmatpush1.msra.mxu0 0.0
    %786 = vmatprep.subr.mxu0 0.0
    %787 = vmatpush1.msra.mxu0 0.0
    %788 = vmatprep.subr.mxu0 0.0
    %789 = vmatpush1.msra.mxu0 0.0
    %790 = vmatprep.subr.mxu0 0.0
    %791 = vmatpush1.msra.mxu0 0.0
    %792 = vmatprep.subr.mxu0 0.0
    %793 = vmatpush1.msra.mxu0 0.0
    %794 = vmatprep.subr.mxu0 0.0
    %795 = vmatpush1.msra.mxu0 0.0
    %796 = vmatprep.subr.mxu0 0.0
    %797 = vmatpush1.msra.mxu0 0.0
    %798 = vmatprep.subr.mxu0 0.0
    %799 = vmatpush1.msra.mxu0 0.0
    %800 = vmatprep.subr.mxu0 0.0
    %801 = vmatpush1.msra.mxu0 0.0
    %802 = vmatprep.subr.mxu0 0.0
    %803 = vmatpush1.msra.mxu0 0.0
    %804 = vmatprep.subr.mxu0 0.0
    %805 = vmatpush1.msra.mxu0 0.0
    %806 = vmatprep.subr.mxu0 0.0
    %807 = vmatpush1.msra.mxu0 0.0
    %808 = vmatprep.subr.mxu0 0.0
    %809 = vmatpush1.msra.mxu0 0.0
    %810 = vmatprep.subr.mxu0 0.0
    %811 = vmatpush1.msra.mxu0 0.0
    %812 = vmatprep.subr.mxu0 0.0
    %813 = vmatpush1.msra.mxu0 %v108
    %814 = vmatprep.subr.mxu0 0.0
    %815 = vmatpush2.msra.mxu0 0.0
    %816 = vmatprep.subr.mxu0 0.0
    %817 = vmatpush2.msra.mxu0 0.0
    %818 = vmatprep.subr.mxu0 0.0
    %819 = vmatpush2.msra.mxu0 0.0
    %820 = vmatprep.subr.mxu0 0.0
    %821 = vmatpush2.msra.mxu0 0.0
    %822 = vmatprep.subr.mxu0 0.0
    %823 = vmatpush2.msra.mxu0 0.0
    %824 = vmatprep.subr.mxu0 0.0
    %825 = vmatpush2.msra.mxu0 0.0
    %826 = vmatprep.subr.mxu0 0.0
    %827 = vmatpush2.msra.mxu0 0.0
    %828 = vmatprep.subr.mxu0 0.0
    %829 = vmatpush2.msra.mxu0 0.0
    %830 = vmatprep.subr.mxu0 0.0
    %831 = vmatpush2.msra.mxu0 0.0
    %832 = vmatprep.subr.mxu0 0.0
    %833 = vmatpush2.msra.mxu0 0.0
    %834 = vmatprep.subr.mxu0 0.0
    %835 = vmatpush2.msra.mxu0 0.0
    %836 = vmatprep.subr.mxu0 0.0
    %837 = vmatpush2.msra.mxu0 0.0
    %838 = vmatprep.subr.mxu0 0.0
    %839 = vmatpush2.msra.mxu0 0.0
    %840 = vmatprep.subr.mxu0 0.0
    %841 = vmatpush2.msra.mxu0 0.0
    %842 = vmatprep.subr.mxu0 0.0
    %843 = vmatpush2.msra.mxu0 0.0
    %844 = vmatprep.subr.mxu0 0.0
    %845 = vmatpush2.msra.mxu0 0.0
    %846 = vmatprep.mubr.f32.mxu0 0.0
    %847 = vmatmul.mubr.f32.gmra.mxu0 %v780
    %v848 = vpop.f32.mrf.mxu0
    %v849 = vadd.f32 0.0, %v848
    %v850 = vpop.f32.mrf.mxu0
    %851 = vdwg.mxu0
    %v852 = vadd.f32 %v556, %v630
    %v853 = vadd.f32 %v557, %v703
    %v854 = vadd.f32 %v558, %v776
    %v855 = vadd.f32 %v559, %v849
    %856 = vst.msk [vmem:[#allocation4] sm:$0xff] %vm109, %v852
    %857 = vst.msk [vmem:[#allocation4 + $0x8] sm:$0xff] %vm109, %v853
    %858 = vst.msk [vmem:[#allocation4 + $0x10] sm:$0xff] %vm109, %v854
    %859 = vst.msk [vmem:[#allocation4 + $0x18] sm:$0xff] %vm109, %v855
    %860 = vst.msk [vmem:[#allocation2] sm:$0xff] %vm527, %v455
    %861 = vst.msk [vmem:[#allocation2 + $0x8] sm:$0xff] %vm527, %v456
    %862 = vst.msk [vmem:[#allocation2 + $0x10] sm:$0xff] %vm527, %v457
    %863 = vst.msk [vmem:[#allocation2 + $0x18] sm:$0xff] %vm527, %v458
    // Predicated region
    $region38: #{tpu_custom_call.1} parent=1 // pred_check
      %p864 = pneg %p75
    $region39: #{tpu_custom_call.1} parent=1 // pred_check_branch
      %866 = sbr.rel (%p864) target = $region41
    $region40: #{tpu_custom_call.1} parent=1 // pred_region
      %v867 = vld [vmem:[#allocation3] sm:$0xff]
      %v868 = vld [vmem:[#allocation3 + $0x8] sm:$0xff]
      %v869 = vld [vmem:[#allocation3 + $0x10] sm:$0xff]
      %v870 = vld [vmem:[#allocation3 + $0x18] sm:$0xff]
      %v871 = vrcp.pop %v867
      %v872 = vrcp.pop %v868
      %v873 = vrcp.pop %v869
      %v874 = vrcp.pop %v870
      %v875 = vld [vmem:[#allocation4] sm:$0xff]
      %v876 = vld [vmem:[#allocation4 + $0x8] sm:$0xff]
      %v877 = vld [vmem:[#allocation4 + $0x10] sm:$0xff]
      %v878 = vld [vmem:[#allocation4 + $0x18] sm:$0xff]
      %880 = vset.pattern.permute.xlu0 0
      %881 = vperm.xlu0 %880, %v871
      %v882 = vpop.permute.xlu0 %881
      %885 = vset.pattern.permute.xlu0 0
      %886 = vperm.xlu0 %885, %v872
      %v887 = vpop.permute.xlu0 %886
      %890 = vset.pattern.permute.xlu0 0
      %891 = vperm.xlu0 %890, %v873
      %v892 = vpop.permute.xlu0 %891
      %895 = vset.pattern.permute.xlu0 0
      %896 = vperm.xlu0 %895, %v874
      %v897 = vpop.permute.xlu0 %896
      %v899 = vmul.f32 %v875, %v882
      %v900 = vmul.f32 %v876, %v887
      %v901 = vmul.f32 %v877, %v892
      %v902 = vmul.f32 %v878, %v897
      %903 = vst.msk [vmem:[#allocation13] sm:$0xff] %vm109, %v899
      %904 = vst.msk [vmem:[#allocation13 + $0x8] sm:$0xff] %vm109, %v900
      %905 = vst.msk [vmem:[#allocation13 + $0x10] sm:$0xff] %vm109, %v901
      %906 = vst.msk [vmem:[#allocation13 + $0x18] sm:$0xff] %vm109, %v902
    $region41: #{tpu_custom_call.1} parent=1 // pred_fallthru
      _
    // Predicated region
    $region42: #{tpu_custom_call.1} parent=1 // pred_check
      _
    $region43: #{tpu_custom_call.1} parent=1 // pred_check_branch
      %908 = sbr.rel (0) target = $region45
    $region44: #{tpu_custom_call.1} parent=1 // pred_region
      %s910 = ssub.s32 512, 512
      %911 = vsyncadd [#allocation7], %s910
      %s912 = sshll.u32 [#allocation13], 4
      %s913 = int_to_ptr.vmem [resolvable:$true] %s912
      %918 = dma.vmem_to_hbm [thread:$0]  %s913, 512, %s4, [#allocation7], 128, 128, 8
    $region45: #{tpu_custom_call.1} parent=1 // pred_fallthru
      _
    // Predicated region
    $region46: #{tpu_custom_call.1} parent=1 // pred_check
      _
    $region47: #{tpu_custom_call.1} parent=1 // pred_check_branch
      %920 = sbr.rel (0) target = $region49
    $region48: #{tpu_custom_call.1} parent=1 // pred_region
      %921 = dma.done [#allocation7], 512
    $region49: #{tpu_custom_call.1} parent=1 // pred_fallthru
      _
    %922 = vsyncpa [#allocation6], 1
    %923 = vsyncpa [#allocation9], 1
    %924 = vsyncpa [#allocation12], 1
    %925 = vsyncpa [#allocation7], 1

</llo_original>
